<compile_context>
chip_gen: v7x
topology: tpu7x:2x2x1
jax: 0.10.0
libtpu: 0.0.40
codegen_flags: <defaults>
</compile_context>

<pallas_src>
import functools

import jax
import jax.numpy as jnp
from jax import lax
from jax.experimental import pallas as pl
from jax.experimental.pallas import tpu as pltpu

IGNORE_INDEX = -100


def _ce2d_kernel(x_ref, t_ref, loss_ref, cnt_ref, *, hw, tile_hw, ignore_index):
    j = pl.program_id(1)

    x = x_ref[0].astype(jnp.float32)        # (C, T): classes on sublanes, pixels on lanes
    t = t_ref[0]                            # (1, T): int32 targets, lane-dense

    # Numerically stable log-sum-exp over the class (sublane) axis.
    m = jnp.max(x, axis=0, keepdims=True)                                 # (1, T)
    lse = jnp.log(jnp.sum(jnp.exp(x - m), axis=0, keepdims=True)) + m     # (1, T)

    # Logit at the target class via a one-hot compare (no dynamic gather on TPU).
    cls = lax.broadcasted_iota(jnp.int32, x.shape, 0)                     # (C, T)
    tgt_logit = jnp.sum(jnp.where(cls == t, x, 0.0), axis=0, keepdims=True)

    # Valid pixels: inside the (possibly partial) last tile and not ignore_index.
    lane = lax.broadcasted_iota(jnp.int32, (1, x.shape[1]), 1)            # (1, T)
    pix_ok = (j * tile_hw + lane) < hw
    valid = jnp.logical_and(pix_ok, t != ignore_index)

    loss = jnp.where(valid, lse - tgt_logit, 0.0)                         # (1, T)

    # Per-block partials (cross-lane reduce uses the XLU slot, hidden under DMA).
    loss_sum = jnp.sum(loss)
    cnt_sum = jnp.sum(valid.astype(jnp.float32))

    # Each grid cell owns its own output block -> both grid axes can be "parallel".
    loss_ref[...] = jnp.broadcast_to(loss_sum, (1, 1, 1, 128))
    cnt_ref[...] = jnp.broadcast_to(cnt_sum, (1, 1, 1, 128))


def _pick_tile_hw(hw, c, itemsize, budget_bytes=16 << 20):
    """Largest 128-multiple pixel tile whose double-buffered input blocks plus a
    few (C, tile) f32 compute temporaries fit the budget (conservative enough for
    v7x's smaller VMEM)."""
    if hw <= 128:
        return int(hw)                               # single full block
    # 2x-buffered logits + int32 targets, plus ~4 f32 (C, tile) temporaries.
    per_col = 2 * (c * itemsize + 4) + 4 * c * 4
    cap = max(128, (budget_bytes // per_col) // 128 * 128)
    full = hw if hw % 128 == 0 else (hw // 128) * 128
    return int(min(cap, full))


def cross_entropy_loss_2d(inputs, targets, *, ignore_index=IGNORE_INDEX, tile_hw=None):
    """inputs: (N, C, H, W) float; targets: (N, H, W) int. Returns scalar f32 mean loss."""
    N, C, H, W = inputs.shape
    HW = H * W

    # Layout glue is reshape-only (no transpose => no extra HBM pass).
    # Logits keep their original dtype (bf16 stays bf16 on the HBM->VMEM path).
    x = inputs.reshape(N, C, HW)
    t = targets.reshape(N, 1, HW).astype(jnp.int32)

    if tile_hw is None:
        tile_hw = _pick_tile_hw(HW, C, x.dtype.itemsize)
    num_j = pl.cdiv(HW, tile_hw)
    grid = (N, num_j)

    loss_p, cnt_p = pl.pallas_call(
        functools.partial(_ce2d_kernel, hw=HW, tile_hw=tile_hw,
                          ignore_index=ignore_index),
        out_shape=(jax.ShapeDtypeStruct((N, num_j, 1, 128), jnp.float32),
                   jax.ShapeDtypeStruct((N, num_j, 1, 128), jnp.float32)),
        grid_spec=pltpu.PrefetchScalarGridSpec(
            num_scalar_prefetch=0,
            grid=grid,
            in_specs=[
                pl.BlockSpec((1, C, tile_hw), lambda n, j: (n, 0, j)),   # logits
                pl.BlockSpec((1, 1, tile_hw), lambda n, j: (n, 0, j)),   # targets
            ],
            out_specs=[
                pl.BlockSpec((1, 1, 1, 128), lambda n, j: (n, j, 0, 0)),  # loss partials
                pl.BlockSpec((1, 1, 1, 128), lambda n, j: (n, j, 0, 0)),  # count partials
            ],
        ),
        compiler_params=pltpu.CompilerParams(
            # Every grid cell writes a disjoint output block, so both axes are
            # fully parallel -> megacore-shards across the two TCs on v7x.
            dimension_semantics=("parallel", "parallel"),
            vmem_limit_bytes=32 * 1024 * 1024,
        ),
    )(x, t)

    # Final (tiny) reduction over per-block partials; size_average=True -> mean
    # over non-ignored pixels (count clamped to avoid 0/0).
    total = jnp.sum(loss_p[:, :, 0, 0])
    count = jnp.sum(cnt_p[:, :, 0, 0])
    return total / jnp.maximum(count, 1.0)


def _reference(inputs, targets, ignore_index=IGNORE_INDEX):
    # Pure-JAX reference (log_softmax on dim=1 + NLL with ignore_index, mean).
    logp = jax.nn.log_softmax(inputs.astype(jnp.float32), axis=1)
    t = targets.astype(jnp.int32)
    valid = t != ignore_index
    tc = jnp.where(valid, t, 0)
    nll = -jnp.take_along_axis(logp, tc[:, None, :, :], axis=1)[:, 0]
    return jnp.sum(jnp.where(valid, nll, 0.0)) / jnp.maximum(
        jnp.sum(valid.astype(jnp.float32)), 1.0)


if __name__ == "__main__":
    key = jax.random.PRNGKey(0)
    k1, k2 = jax.random.split(key)

    N, C, H, W = 2, 4, 16, 16
    inputs = jax.random.normal(k1, (N, C, H, W), dtype=jnp.float32)
    targets = jax.random.randint(k2, (N, H, W), 0, C, dtype=jnp.int32)
    # A few ignored pixels to exercise ignore_index=-100 handling.
    targets = targets.at[0, 0, :3].set(IGNORE_INDEX)

    loss = cross_entropy_loss_2d(inputs, targets)
    jax.block_until_ready(loss)

    ref = _reference(inputs, targets)
    assert jnp.allclose(loss, ref, atol=1e-5, rtol=1e-5), (loss, ref)

    print("KERNEL_OK")
</pallas_src>

<mosaic_0001>
module attributes {stable_mosaic.version = 11 : i64} {
  func.func @_ce2d_kernel(%arg0: i32, %arg1: i32, %arg2: memref<1x4x256xf32, #tpu.memory_space<vmem>>, %arg3: memref<1x1x256xi32, #tpu.memory_space<vmem>>, %arg4: memref<1x1x1x128xf32, #tpu.memory_space<vmem>>, %arg5: memref<1x1x1x128xf32, #tpu.memory_space<vmem>>) attributes {dimension_semantics = [#tpu.dimension_semantics<parallel>, #tpu.dimension_semantics<parallel>], iteration_bounds = array<i64: 2, 1>, scalar_prefetch = 0 : i64, scratch_operands = 0 : i64, tpu.core_type = #tpu.core_type<tc>, window_params = [{transform_indices = @transform_0, window_bounds = array<i64: 1, 4, 256>}, {transform_indices = @transform_1, window_bounds = array<i64: 1, 1, 256>}, {transform_indices = @transform_2, window_bounds = array<i64: 1, 1, 1, 128>}, {transform_indices = @transform_3, window_bounds = array<i64: 1, 1, 1, 128>}]} {
    %c0 = arith.constant 0 : index
    %c0_0 = arith.constant 0 : index
    %c0_1 = arith.constant 0 : index
    %0 = vector.load %arg2[%c0, %c0_0, %c0_1] : memref<1x4x256xf32, #tpu.memory_space<vmem>>, vector<1x4x256xf32>
    %1 = vector.shape_cast %0 : vector<1x4x256xf32> to vector<4x256xf32>
    %c0_2 = arith.constant 0 : index
    %c0_3 = arith.constant 0 : index
    %c0_4 = arith.constant 0 : index
    %2 = vector.load %arg3[%c0_2, %c0_3, %c0_4] : memref<1x1x256xi32, #tpu.memory_space<vmem>>, vector<1x1x256xi32>
    %3 = vector.shape_cast %2 : vector<1x1x256xi32> to vector<1x256xi32>
    %cst = arith.constant dense<0xFF800000> : vector<256xf32>
    %4 = vector.multi_reduction <maximumf>, %1, %cst [0] : vector<4x256xf32> to vector<256xf32>
    %5 = vector.shape_cast %4 : vector<256xf32> to vector<1x256xf32>
    %6 = vector.broadcast %5 : vector<1x256xf32> to vector<4x256xf32>
    %7 = arith.subf %1, %6 : vector<4x256xf32>
    %8 = math.exp %7 : vector<4x256xf32>
    %cst_5 = arith.constant dense<0.000000e+00> : vector<256xf32>
    %9 = vector.multi_reduction <add>, %8, %cst_5 [0] : vector<4x256xf32> to vector<256xf32>
    %10 = vector.shape_cast %9 : vector<256xf32> to vector<1x256xf32>
    %11 = math.log %10 : vector<1x256xf32>
    %12 = arith.addf %11, %5 : vector<1x256xf32>
    %13 = tpu.iota {dimensions = array<i32: 0>} : vector<4x256xi32>
    %14 = vector.broadcast %3 : vector<1x256xi32> to vector<4x256xi32>
    %15 = arith.cmpi eq, %13, %14 : vector<4x256xi32>
    %cst_6 = arith.constant 0.000000e+00 : f32
    %16 = vector.broadcast %cst_6 : f32 to vector<4x256xf32>
    %17 = arith.select %15, %1, %16 : vector<4x256xi1>, vector<4x256xf32>
    %cst_7 = arith.constant dense<0.000000e+00> : vector<256xf32>
    %18 = vector.multi_reduction <add>, %17, %cst_7 [0] : vector<4x256xf32> to vector<256xf32>
    %19 = vector.shape_cast %18 : vector<256xf32> to vector<1x256xf32>
    %20 = tpu.iota {dimensions = array<i32: 1>} : vector<1x256xi32>
    %c256_i32 = arith.constant 256 : i32
    %21 = arith.muli %arg1, %c256_i32 : i32
    %22 = vector.broadcast %21 : i32 to vector<1x256xi32>
    %23 = arith.addi %22, %20 : vector<1x256xi32>
    %c256_i32_8 = arith.constant 256 : i32
    %24 = vector.broadcast %c256_i32_8 : i32 to vector<1x256xi32>
    %25 = arith.cmpi slt, %23, %24 : vector<1x256xi32>
    %c-100_i32 = arith.constant -100 : i32
    %26 = vector.broadcast %c-100_i32 : i32 to vector<1x256xi32>
    %27 = arith.cmpi ne, %3, %26 : vector<1x256xi32>
    %28 = arith.andi %25, %27 : vector<1x256xi1>
    %29 = arith.subf %12, %19 : vector<1x256xf32>
    %cst_9 = arith.constant 0.000000e+00 : f32
    %30 = vector.broadcast %cst_9 : f32 to vector<1x256xf32>
    %31 = arith.select %28, %29, %30 : vector<1x256xi1>, vector<1x256xf32>
    %32 = vector.shape_cast %31 : vector<1x256xf32> to vector<1x1x256xf32>
    %cst_10 = arith.constant dense<0.000000e+00> : vector<1xf32>
    %33 = vector.multi_reduction <add>, %32, %cst_10 [1, 2] : vector<1x1x256xf32> to vector<1xf32>
    %34 = vector.shape_cast %33 : vector<1xf32> to vector<1x1x1xf32>
    %35 = vector.extract %34[0, 0, 0] : f32 from vector<1x1x1xf32>
    %36 = arith.extui %28 : vector<1x256xi1> to vector<1x256xi32>
    %37 = arith.sitofp %36 : vector<1x256xi32> to vector<1x256xf32>
    %38 = vector.shape_cast %37 : vector<1x256xf32> to vector<1x1x256xf32>
    %cst_11 = arith.constant dense<0.000000e+00> : vector<1xf32>
    %39 = vector.multi_reduction <add>, %38, %cst_11 [1, 2] : vector<1x1x256xf32> to vector<1xf32>
    %40 = vector.shape_cast %39 : vector<1xf32> to vector<1x1x1xf32>
    %41 = vector.extract %40[0, 0, 0] : f32 from vector<1x1x1xf32>
    %42 = vector.broadcast %35 : f32 to vector<1x1x1x128xf32>
    %c0_12 = arith.constant 0 : index
    %c0_13 = arith.constant 0 : index
    %c0_14 = arith.constant 0 : index
    %c0_15 = arith.constant 0 : index
    %43 = vector.load %arg4[%c0_12, %c0_13, %c0_14, %c0_15] : memref<1x1x1x128xf32, #tpu.memory_space<vmem>>, vector<1x1x1x128xf32>
    tpu.vector_store %arg4[%c0_12, %c0_13, %c0_14, %c0_15], %42 {strides = array<i32>} : memref<1x1x1x128xf32, #tpu.memory_space<vmem>>, vector<1x1x1x128xf32>,
    %44 = vector.broadcast %41 : f32 to vector<1x1x1x128xf32>
    %c0_16 = arith.constant 0 : index
    %c0_17 = arith.constant 0 : index
    %c0_18 = arith.constant 0 : index
    %c0_19 = arith.constant 0 : index
    %45 = vector.load %arg5[%c0_16, %c0_17, %c0_18, %c0_19] : memref<1x1x1x128xf32, #tpu.memory_space<vmem>>, vector<1x1x1x128xf32>
    tpu.vector_store %arg5[%c0_16, %c0_17, %c0_18, %c0_19], %44 {strides = array<i32>} : memref<1x1x1x128xf32, #tpu.memory_space<vmem>>, vector<1x1x1x128xf32>,
    return
  }
  func.func @transform_0(%arg0: i32, %arg1: i32) -> (i32, i32, i32) {
    %c0_i32 = arith.constant 0 : i32
    %c0_i32_0 = arith.constant 0 : i32
    return %arg0, %c0_i32, %arg1 : i32, i32, i32
  }
  func.func @transform_1(%arg0: i32, %arg1: i32) -> (i32, i32, i32) {
    %c0_i32 = arith.constant 0 : i32
    %c0_i32_0 = arith.constant 0 : i32
    return %arg0, %c0_i32, %arg1 : i32, i32, i32
  }
  func.func @transform_2(%arg0: i32, %arg1: i32) -> (i32, i32, i32, i32) {
    %c0_i32 = arith.constant 0 : i32
    %c0_i32_0 = arith.constant 0 : i32
    %c0_i32_1 = arith.constant 0 : i32
    return %arg0, %arg1, %c0_i32, %c0_i32_0 : i32, i32, i32, i32
  }
  func.func @transform_3(%arg0: i32, %arg1: i32) -> (i32, i32, i32, i32) {
    %c0_i32 = arith.constant 0 : i32
    %c0_i32_0 = arith.constant 0 : i32
    %c0_i32_1 = arith.constant 0 : i32
    return %arg0, %arg1, %c0_i32, %c0_i32_0 : i32, i32, i32, i32
  }
}

</mosaic_0001>

<llo_original>
// kernel: tpu_custom_call.1
$region0: #{tpu_custom_call.1}
  #allocation0 [shape = 'u32[]', space=smem, size = 0x4, offset = 0x4, fixed_abs, tag = 'smem constant byte address 0x4 - core index']
  #allocation1 [shape = 'u32[144,128]{1,0:T(1,128)}', space=vmem, size = 0x12000, scoped, tag = 'internal scratch']
  %s0 = inlined_call_operand.hbm [shape: f32[2,4,256], index: 0, kind: input, shape index: {}]
  %s1 = inlined_call_operand.hbm [shape: s32[2,1,256], index: 1, kind: input, shape index: {}]
  %s2 = inlined_call_operand.hbm [shape: f32[2,1,1,128], index: 2, kind: output, shape index: {0}]
  %s3 = inlined_call_operand.hbm [shape: f32[2,1,1,128], index: 3, kind: output, shape index: {1}]
  %4 = xla_tuple %s2, %s3
  %s5 = sld [smem:[#allocation0]]
  $region57: #{tpu_custom_call.1} parent=0
    _
  %s7 = ssub.s32 1, %s5
  %s8 = scalar_select 0, %s7, %s5
  $region1: #{tpu_custom_call.1} parent=0
    #allocation2 [shape = 'u8[8192]{0}', space=vmem, size = 0x2000, scoped, tag = 'input window, operand 0']
    #allocation3 [shape = 's32[2]{0}', space=sflag, size = 0x8, scoped, tag = 'scoped memory for tpu_custom_call.1']
    #allocation4 [shape = 's32[2]{0}', space=sflag, size = 0x8, scoped, tag = 'scoped memory for tpu_custom_call.1']
    #allocation5 [shape = 'u8[2048]{0}', space=vmem, size = 0x800, scoped, tag = 'input window, operand 1']
    #allocation6 [shape = 's32[2]{0}', space=sflag, size = 0x8, scoped, tag = 'scoped memory for tpu_custom_call.1']
    #allocation7 [shape = 'u8[1024]{0}', space=vmem, size = 0x400, scoped, tag = 'output window, operand 0']
    #allocation8 [shape = 'u8[1024]{0}', space=vmem, size = 0x400, scoped, tag = 'output window, operand 1']
    #allocation9 [shape = 's32[2]{0}', space=sflag, size = 0x8, scoped, tag = 'scoped memory for tpu_custom_call.1']
    %9 = vsyncpa [#allocation3], 0
    %s10 = scalar_lea.sflag [#allocation3], 1
    %11 = vsyncpa %s10, 0
    %12 = vsyncpa [#allocation6], 0
    %s13 = scalar_lea.sflag [#allocation6], 1
    %14 = vsyncpa %s13, 0
    %15 = vsyncpa [#allocation4], 0
    %s16 = scalar_lea.sflag [#allocation4], 1
    %17 = vsyncpa %s16, 0
    %18 = vsyncpa [#allocation9], 0
    %s19 = scalar_lea.sflag [#allocation9], 1
    %20 = vsyncpa %s19, 0
    loop: start=0, step=1, limit=4
    $region2: #{tpu_custom_call.1} parent=1 // loop_pre_header
      _
    $region3: #{tpu_custom_call.1} parent=1 // loop_header
      %s22 = sphi 0, %s26
      %p23 = scmp.ge.s32.totalorder %s22, 4
      %s29 = sphi 0, %s41
      %s30 = sphi 0, %s37
      %s31 = sphi 0, %s29
      %s32 = sphi 0, %s30
      %s33 = sphi 0, %s31
      %s34 = sphi 0, %s32
      %s46 = sphi 0, %s48
      %s49 = sphi 0, %s46
      %s50 = sphi 0, %s49
      %s66 = sphi 0, %s50
      %s74 = sphi 0, %s76
      %s77 = sphi 0, %s74
      %s78 = sphi 0, %s77
      %s94 = sphi 0, %s78
      %s102 = sphi 0, %s104
      %s105 = sphi 0, %s102
      %s106 = sphi 0, %s105
      %s122 = sphi 0, %s106
      %s130 = sphi 0, %s132
      %s133 = sphi 0, %s130
      %s134 = sphi 0, %s133
      %s150 = sphi 0, %s134
    $region4: #{tpu_custom_call.1} parent=1 // loop_header_branch
      %25 = sbr.rel (%p23) target = $region8
    $region5: #{tpu_custom_call.1} parent=1 // loop_body
      %s27 = ssub.s32 %s22, 1
      %s28 = ssub.s32 %s22, 2
      %s35 = sadd.s32 1, %s30
      %p36 = scmp.ge.s32.totalorder %s35, 1
      %s37 = scalar_select %p36, 0, %s35
      %s38 = sadd.s32 1, %s29
      %s39 = scalar_select %p36, %s38, %s29
      %p40 = scmp.ge.s32.totalorder %s39, 2
      %s41 = scalar_select %p40, 0, %s39
      %s42 = ssub.s32 %s29, %s41
      %s43 = ssub.s32 %s30, %s37
      %s44 = sor.u32 %s42, %s43
      %p45 = scmp.eq.s32.totalorder %s44, 0
      %s47 = sadd.s32 %s46, 1
      %s48 = scalar_select %p45, %s46, %s47
      %p51 = pneg %p45
      %p52 = scmp.eq.s32.totalorder %s22, 1
      %p53 = por %p51, %p52
      %p54 = scmp.ne.s32.totalorder %s46, %s49
      %p55 = scmp.eq.s32.totalorder %s22, 0
      %p56 = por %p54, %p55
      %p57 = scmp.ne.s32.totalorder %s46, %s49
      %p58 = scmp.eq.s32.totalorder %s27, 1
      %p59 = por %p57, %p58
      %p60 = scmp.ne.s32.totalorder %s49, %s50
      %p61 = scmp.eq.s32.totalorder %s27, 0
      %p62 = por %p60, %p61
      %p63 = scmp.ne.s32.totalorder %s49, %s50
      %p64 = scmp.eq.s32.totalorder %s28, 1
      %p65 = por %p63, %p64
      %p67 = scmp.ne.s32.totalorder %s50, %s66
      %p68 = scmp.eq.s32.totalorder %s28, 0
      %p69 = por %p67, %p68
      %s70 = ssub.s32 %s29, %s41
      %s71 = ssub.s32 %s30, %s37
      %s72 = sor.u32 %s70, %s71
      %p73 = scmp.eq.s32.totalorder %s72, 0
      %s75 = sadd.s32 %s74, 1
      %s76 = scalar_select %p73, %s74, %s75
      %p79 = pneg %p73
      %p80 = scmp.eq.s32.totalorder %s22, 1
      %p81 = por %p79, %p80
      %p82 = scmp.ne.s32.totalorder %s74, %s77
      %p83 = scmp.eq.s32.totalorder %s22, 0
      %p84 = por %p82, %p83
      %p85 = scmp.ne.s32.totalorder %s74, %s77
      %p86 = scmp.eq.s32.totalorder %s27, 1
      %p87 = por %p85, %p86
      %p88 = scmp.ne.s32.totalorder %s77, %s78
      %p89 = scmp.eq.s32.totalorder %s27, 0
      %p90 = por %p88, %p89
      %p91 = scmp.ne.s32.totalorder %s77, %s78
      %p92 = scmp.eq.s32.totalorder %s28, 1
      %p93 = por %p91, %p92
      %p95 = scmp.ne.s32.totalorder %s78, %s94
      %p96 = scmp.eq.s32.totalorder %s28, 0
      %p97 = por %p95, %p96
      %s98 = ssub.s32 %s29, %s41
      %s99 = ssub.s32 %s30, %s37
      %s100 = sor.u32 %s98, %s99
      %p101 = scmp.eq.s32.totalorder %s100, 0
      %s103 = sadd.s32 %s102, 1
      %s104 = scalar_select %p101, %s102, %s103
      %p107 = pneg %p101
      %p108 = scmp.eq.s32.totalorder %s22, 1
      %p109 = por %p107, %p108
      %p110 = scmp.ne.s32.totalorder %s102, %s105
      %p111 = scmp.eq.s32.totalorder %s22, 0
      %p112 = por %p110, %p111
      %p113 = scmp.ne.s32.totalorder %s102, %s105
      %p114 = scmp.eq.s32.totalorder %s27, 1
      %p115 = por %p113, %p114
      %p116 = scmp.ne.s32.totalorder %s105, %s106
      %p117 = scmp.eq.s32.totalorder %s27, 0
      %p118 = por %p116, %p117
      %p119 = scmp.ne.s32.totalorder %s105, %s106
      %p120 = scmp.eq.s32.totalorder %s28, 1
      %p121 = por %p119, %p120
      %p123 = scmp.ne.s32.totalorder %s106, %s122
      %p124 = scmp.eq.s32.totalorder %s28, 0
      %p125 = por %p123, %p124
      %s126 = ssub.s32 %s29, %s41
      %s127 = ssub.s32 %s30, %s37
      %s128 = sor.u32 %s126, %s127
      %p129 = scmp.eq.s32.totalorder %s128, 0
      %s131 = sadd.s32 %s130, 1
      %s132 = scalar_select %p129, %s130, %s131
      %p135 = pneg %p129
      %p136 = scmp.eq.s32.totalorder %s22, 1
      %p137 = por %p135, %p136
      %p138 = scmp.ne.s32.totalorder %s130, %s133
      %p139 = scmp.eq.s32.totalorder %s22, 0
      %p140 = por %p138, %p139
      %p141 = scmp.ne.s32.totalorder %s130, %s133
      %p142 = scmp.eq.s32.totalorder %s27, 1
      %p143 = por %p141, %p142
      %p144 = scmp.ne.s32.totalorder %s133, %s134
      %p145 = scmp.eq.s32.totalorder %s27, 0
      %p146 = por %p144, %p145
      %p147 = scmp.ne.s32.totalorder %s133, %s134
      %p148 = scmp.eq.s32.totalorder %s28, 1
      %p149 = por %p147, %p148
      %p151 = scmp.ne.s32.totalorder %s134, %s150
      %p152 = scmp.eq.s32.totalorder %s28, 0
      %p153 = por %p151, %p152
      %p154 = scmp.le.s32.totalorder 1, %s22
      %p155 = scmp.lt.s32.totalorder %s22, 3
      %p156 = pnand %p154, %p155
      %p157 = pneg %p156
      // Predicated region
      $region9: #{tpu_custom_call.1} parent=5 // pred_check
        _
      $region10: #{tpu_custom_call.1} parent=5 // pred_check_branch
        %159 = sbr.rel (%p156) target = $region12
      $region11: #{tpu_custom_call.1} parent=5 // pred_region
        %s160 = ssub.s32 %s22, 1
      $region12: #{tpu_custom_call.1} parent=5 // pred_fallthru
        _
      %p161 = scmp.lt.s32.totalorder %s22, 2
      // Predicated region
      $region13: #{tpu_custom_call.1} parent=5 // pred_check
        %p162 = pneg %p161
      $region14: #{tpu_custom_call.1} parent=5 // pred_check_branch
        %164 = sbr.rel (%p162) target = $region16
      $region15: #{tpu_custom_call.1} parent=5 // pred_region
        // Predicated region
        $region17: #{tpu_custom_call.1} parent=15 // pred_check
          %p165 = pneg %p56
        $region18: #{tpu_custom_call.1} parent=15 // pred_check_branch
          %167 = sbr.rel (%p165) target = $region20
        $region19: #{tpu_custom_call.1} parent=15 // pred_region
          %s168 = sand.u32 %s46, 1
          %s169 = scalar_lea.sflag [#allocation3], %s168
          %s170 = sand.u32 %s46, 1
          %s171 = smul.addr %s170, 8
          %s172 = scalar_lea.vmem [#allocation2], %s171
          %s173 = smul.u32 2, %s30
          %s175 = ssub.s32 128, 128
          %176 = vsyncadd %s169, %s175
          %s177 = smul.addr %s29, 2
          %s178 = sadd.s32 %s173, %s177
          %s179 = smul.addr %s178, 64
          %s180 = scalar_lea.hbm %s0, %s179
          %s182 = sshll.u32 %s172, 4
          %s183 = int_to_ptr.vmem [resolvable:$true] %s182
          %185 = dma.hbm_to_vmem [thread:$0]  %s180, 128, %s183, %s169
        $region20: #{tpu_custom_call.1} parent=15 // pred_fallthru
          _
        // Predicated region
        $region21: #{tpu_custom_call.1} parent=15 // pred_check
          %p186 = pneg %p84
        $region22: #{tpu_custom_call.1} parent=15 // pred_check_branch
          %188 = sbr.rel (%p186) target = $region24
        $region23: #{tpu_custom_call.1} parent=15 // pred_region
          %s189 = sand.u32 %s74, 1
          %s190 = scalar_lea.sflag [#allocation6], %s189
          %s191 = sand.u32 %s74, 1
          %s192 = smul.addr %s191, 2
          %s193 = scalar_lea.vmem [#allocation5], %s192
          %s194 = smul.u32 2, %s30
          %s196 = ssub.s32 32, 32
          %197 = vsyncadd %s190, %s196
          %s198 = smul.addr %s29, 2
          %s199 = sadd.s32 %s194, %s198
          %s200 = smul.addr %s199, 16
          %s201 = scalar_lea.hbm %s1, %s200
          %s203 = sshll.u32 %s193, 4
          %s204 = int_to_ptr.vmem [resolvable:$true] %s203
          %206 = dma.hbm_to_vmem [thread:$0]  %s201, 32, %s204, %s190
        $region24: #{tpu_custom_call.1} parent=15 // pred_fallthru
          _
      $region16: #{tpu_custom_call.1} parent=5 // pred_fallthru
        _
      %p207 = scmp.le.s32.totalorder 1, %s22
      %p208 = scmp.lt.s32.totalorder %s22, 3
      %p209 = pnand %p207, %p208
      %p210 = pneg %p209
      // Predicated region
      $region25: #{tpu_custom_call.1} parent=5 // pred_check
        _
      $region26: #{tpu_custom_call.1} parent=5 // pred_check_branch
        %212 = sbr.rel (%p209) target = $region28
      $region27: #{tpu_custom_call.1} parent=5 // pred_region
        %s213 = ssub.s32 %s22, 1
        %s214 = sand.u32 %s49, 1
        %s215 = scalar_lea.sflag [#allocation3], %s214
        %s216 = sand.u32 %s49, 1
        %s217 = smul.addr %s216, 8
        %s218 = scalar_lea.vmem [#allocation2], %s217
        // Predicated region
        $region29: #{tpu_custom_call.1} parent=27 // pred_check
          %p219 = pneg %p62
        $region30: #{tpu_custom_call.1} parent=27 // pred_check_branch
          %221 = sbr.rel (%p219) target = $region32
        $region31: #{tpu_custom_call.1} parent=27 // pred_region
          %222 = dma.done %s215, 128
        $region32: #{tpu_custom_call.1} parent=27 // pred_fallthru
          _
        %s223 = sand.u32 %s77, 1
        %s224 = scalar_lea.sflag [#allocation6], %s223
        %s225 = sand.u32 %s77, 1
        %s226 = smul.addr %s225, 2
        %s227 = scalar_lea.vmem [#allocation5], %s226
        // Predicated region
        $region33: #{tpu_custom_call.1} parent=27 // pred_check
          %p228 = pneg %p90
        $region34: #{tpu_custom_call.1} parent=27 // pred_check_branch
          %230 = sbr.rel (%p228) target = $region36
        $region35: #{tpu_custom_call.1} parent=27 // pred_region
          %231 = dma.done %s224, 32
        $region36: #{tpu_custom_call.1} parent=27 // pred_fallthru
          _
        %s232 = sand.u32 %s49, 1
        %s233 = scalar_lea.sflag [#allocation3], %s232
        %s234 = sand.u32 %s49, 1
        %s235 = smul.addr %s234, 8
        %s236 = scalar_lea.vmem [#allocation2], %s235
        %p237 = pneg %p62
        %p238 = pneg %p59
        %s239 = sand.u32 %s77, 1
        %s240 = scalar_lea.sflag [#allocation6], %s239
        %s241 = sand.u32 %s77, 1
        %s242 = smul.addr %s241, 2
        %s243 = scalar_lea.vmem [#allocation5], %s242
        %p244 = pneg %p90
        %p245 = pneg %p87
        %p246 = pneg %p118
        %p247 = pneg %p115
        %s248 = sand.u32 %s105, 1
        %s249 = scalar_lea.sflag [#allocation4], %s248
        %s250 = sand.u32 %s105, 1
        %s251 = scalar_lea.vmem [#allocation7], %s250
        %p252 = pneg %p146
        %p253 = pneg %p143
        %s254 = sand.u32 %s133, 1
        %s255 = scalar_lea.sflag [#allocation9], %s254
        %s256 = sand.u32 %s133, 1
        %s257 = scalar_lea.vmem [#allocation8], %s256
        %s258 = smul.u32 2, %s32
        %s259 = smul.u32 2, %s32
        %v260 = vld [vmem:[%s218] sm:$0xff]
        %v261 = vld [vmem:[%s227] sm:$0x3]
        %v263 = vcombine.high %v260, %v260
        %vm265 = vcmask 1043456
        %v266 = vsel %vm265, %v260, -inf
        %v267 = vrot.slane %v266, 4
        %v268 = vmax.f32 %v266, %v267
        %v269 = vrot.slane %v268, 2
        %v270 = vmax.f32 %v268, %v269
        %v271 = vrot.slane %v270, 1
        %v272 = vmax.f32 %v270, %v271
        %v273 = vsel %vm265, %v263, -inf
        %v274 = vrot.slane %v273, 4
        %v275 = vmax.f32 %v273, %v274
        %v276 = vrot.slane %v275, 2
        %v277 = vmax.f32 %v275, %v276
        %v278 = vrot.slane %v277, 1
        %v279 = vmax.f32 %v277, %v278
        %v282 = vcombine.low %v272, %v279
        %v284 = vsub.f32 %v260, %v282
        %v285 = vmul.f32 %v284, 1.442695
        %v286 = vpow.pop %v285
        %v288 = vcombine.high %v286, %v286
        %v290 = vsel %vm265, %v286, 0.0
        %v291 = vrot.slane %v290, 4
        %v292 = vadd.f32 %v290, %v291
        %v293 = vrot.slane %v292, 2
        %v294 = vadd.f32 %v292, %v293
        %v295 = vrot.slane %v294, 1
        %v296 = vadd.f32 %v294, %v295
        %v297 = vsel %vm265, %v288, 0.0
        %v298 = vrot.slane %v297, 4
        %v299 = vadd.f32 %v297, %v298
        %v300 = vrot.slane %v299, 2
        %v301 = vadd.f32 %v299, %v300
        %v302 = vrot.slane %v301, 1
        %v303 = vadd.f32 %v301, %v302
        %v304 = vlog2.pop %v296
        %v305 = vmul.f32 %v304, 0.6931472
        %v306 = vlog2.pop %v303
        %v307 = vmul.f32 %v306, 0.6931472
        %v308 = vadd.f32 %v305, %v272
        %v309 = vadd.f32 %v307, %v279
        %v310 = vlaneseq
        %v311 = vshrl.u32 %v310, 7
        %v312 = vlaneseq
        %v313 = vshrl.u32 %v312, 7
        %v314 = vsub.s32 0, %v313
        %v315 = vrot.slane %v261, %v314
        %v316 = vlaneseq
        %v317 = vshrl.u32 %v316, 7
        %v318 = vsub.s32 1, %v317
        %v319 = vrot.slane %v261, %v318
        %vm320 = vcmp.eq.s32.totalorder %v311, %v315
        %vm321 = vcmp.eq.s32.totalorder %v311, %v319
        %v322 = vsel %vm320, %v260, 0.0
        %v323 = vsel %vm321, %v263, 0.0
        %v324 = vsel %vm265, %v322, 0.0
        %v325 = vrot.slane %v324, 4
        %v326 = vadd.f32 %v324, %v325
        %v327 = vrot.slane %v326, 2
        %v328 = vadd.f32 %v326, %v327
        %v329 = vrot.slane %v328, 1
        %v330 = vadd.f32 %v328, %v329
        %v331 = vsel %vm265, %v323, 0.0
        %v332 = vrot.slane %v331, 4
        %v333 = vadd.f32 %v331, %v332
        %v334 = vrot.slane %v333, 2
        %v335 = vadd.f32 %v333, %v334
        %v336 = vrot.slane %v335, 1
        %v337 = vadd.f32 %v335, %v336
        %v338 = vlaneseq
        %v339 = vand.u32 %v338, 127
        %v340 = vadd.s32 %v339, 128
        %s341 = smul.u32 %s32, 256
        %v342 = vstv %s341
        %v343 = vadd.s32 %v342, %v339
        %v344 = vadd.s32 %v342, %v340
        %vm345 = vcmp.lt.s32.totalorder %v343, 256
        %vm346 = vcmp.lt.s32.totalorder %v344, 256
        %vm347 = vcmp.ne.s32.totalorder %v261, 4294967196
        %v348 = vsel %vm347, 1, 0
        %v349 = vlaneseq
        %v350 = vshrl.u32 %v349, 7
        %v351 = vsub.s32 0, %v350
        %v352 = vrot.slane %v348, %v351
        %v353 = vlaneseq
        %v354 = vshrl.u32 %v353, 7
        %v355 = vsub.s32 1, %v354
        %v356 = vrot.slane %v348, %v355
        %vm357 = vcmp.ne.s32.totalorder %v352, 0
        %vm358 = vcmp.ne.s32.totalorder %v356, 0
        %vm359 = vmand %vm345, %vm357
        %vm360 = vmand %vm346, %vm358
        %v361 = vsub.f32 %v308, %v330
        %v362 = vsub.f32 %v309, %v337
        %v363 = vsel %vm359, %v361, 0.0
        %v364 = vsel %vm360, %v362, 0.0
        %vm365 = vcmask 1040384
        %v366 = vsel %vm365, %v363, 0.0
        %v367 = vsel %vm365, %v364, 0.0
        %v368 = vadd.f32 %v366, %v367
        %369 = vadd.xlane.f32.xlu0 %v368
        %v370 = vpop.xlane.xlu0 %369
        %v371 = vrot.slane %v370, 4
        %v372 = vadd.f32 %v370, %v371
        %v373 = vrot.slane %v372, 2
        %v374 = vadd.f32 %v372, %v373
        %v375 = vrot.slane %v374, 1
        %v376 = vadd.f32 %v374, %v375
        %s377 = vtos %v376
        %v378 = vsel %vm359, 1, 0
        %v379 = vsel %vm360, 1, 0
        %v380 = vcvt.s32.f32 %v378
        %v381 = vcvt.s32.f32 %v379
        %v382 = vsel %vm365, %v380, 0.0
        %v383 = vsel %vm365, %v381, 0.0
        %v384 = vadd.f32 %v382, %v383
        %385 = vadd.xlane.f32.xlu0 %v384
        %v386 = vpop.xlane.xlu0 %385
        %v387 = vrot.slane %v386, 4
        %v388 = vadd.f32 %v386, %v387
        %v389 = vrot.slane %v388, 2
        %v390 = vadd.f32 %v388, %v389
        %v391 = vrot.slane %v390, 1
        %v392 = vadd.f32 %v390, %v391
        %s393 = vtos %v392
        %v394 = vstv %s377
        %395 = vst [vmem:[%s251] sm:$0x1] %v394
        %v396 = vstv %s393
        %397 = vst [vmem:[%s257] sm:$0x1] %v396
        %s398 = sand.u32 %s105, 1
        %s399 = scalar_lea.sflag [#allocation4], %s398
        %s400 = sand.u32 %s105, 1
        %s401 = scalar_lea.vmem [#allocation7], %s400
        %s402 = sand.u32 %s133, 1
        %s403 = scalar_lea.sflag [#allocation9], %s402
        %s404 = sand.u32 %s133, 1
        %s405 = scalar_lea.vmem [#allocation8], %s404
        // Predicated region
        $region37: #{tpu_custom_call.1} parent=27 // pred_check
          %p406 = pneg %p115
        $region38: #{tpu_custom_call.1} parent=27 // pred_check_branch
          %408 = sbr.rel (%p406) target = $region40
        $region39: #{tpu_custom_call.1} parent=27 // pred_region
          %s410 = ssub.s32 16, 16
          %411 = vsyncadd %s399, %s410
          %s412 = sadd.s32 %s32, %s31
          %s413 = smul.addr %s412, 16
          %s414 = scalar_lea.hbm %s2, %s413
          %s416 = sshll.u32 %s401, 4
          %s417 = int_to_ptr.vmem [resolvable:$true] %s416
          %419 = dma.vmem_to_hbm [thread:$0]  %s417, 16, %s414, %s399
        $region40: #{tpu_custom_call.1} parent=27 // pred_fallthru
          _
        // Predicated region
        $region41: #{tpu_custom_call.1} parent=27 // pred_check
          %p420 = pneg %p143
        $region42: #{tpu_custom_call.1} parent=27 // pred_check_branch
          %422 = sbr.rel (%p420) target = $region44
        $region43: #{tpu_custom_call.1} parent=27 // pred_region
          %s424 = ssub.s32 16, 16
          %425 = vsyncadd %s403, %s424
          %s426 = sadd.s32 %s32, %s31
          %s427 = smul.addr %s426, 16
          %s428 = scalar_lea.hbm %s3, %s427
          %s430 = sshll.u32 %s405, 4
          %s431 = int_to_ptr.vmem [resolvable:$true] %s430
          %433 = dma.vmem_to_hbm [thread:$0]  %s431, 16, %s428, %s403
        $region44: #{tpu_custom_call.1} parent=27 // pred_fallthru
          _
      $region28: #{tpu_custom_call.1} parent=5 // pred_fallthru
        _
      %p434 = scmp.le.s32.totalorder 2, %s22
      // Predicated region
      $region45: #{tpu_custom_call.1} parent=5 // pred_check
        %p435 = pneg %p434
      $region46: #{tpu_custom_call.1} parent=5 // pred_check_branch
        %437 = sbr.rel (%p435) target = $region48
      $region47: #{tpu_custom_call.1} parent=5 // pred_region
        %s438 = ssub.s32 %s22, 2
        // Predicated region
        $region49: #{tpu_custom_call.1} parent=47 // pred_check
          %p439 = pneg %p121
        $region50: #{tpu_custom_call.1} parent=47 // pred_check_branch
          %441 = sbr.rel (%p439) target = $region52
        $region51: #{tpu_custom_call.1} parent=47 // pred_region
          %s442 = sand.u32 %s106, 1
          %s443 = scalar_lea.sflag [#allocation4], %s442
          %s444 = sand.u32 %s106, 1
          %s445 = scalar_lea.vmem [#allocation7], %s444
          %446 = dma.done %s443, 16
        $region52: #{tpu_custom_call.1} parent=47 // pred_fallthru
          _
        // Predicated region
        $region53: #{tpu_custom_call.1} parent=47 // pred_check
          %p447 = pneg %p149
        $region54: #{tpu_custom_call.1} parent=47 // pred_check_branch
          %449 = sbr.rel (%p447) target = $region56
        $region55: #{tpu_custom_call.1} parent=47 // pred_region
          %s450 = sand.u32 %s134, 1
          %s451 = scalar_lea.sflag [#allocation9], %s450
          %s452 = sand.u32 %s134, 1
          %s453 = scalar_lea.vmem [#allocation8], %s452
          %454 = dma.done %s451, 16
        $region56: #{tpu_custom_call.1} parent=47 // pred_fallthru
          _
      $region48: #{tpu_custom_call.1} parent=5 // pred_fallthru
        _
    $region6: #{tpu_custom_call.1} parent=1 // loop_footer
      %s26 = sadd.s32 1, %s22
    $region7: #{tpu_custom_call.1} parent=1 // loop_footer_branch
      %21 = sbr.rel target = $region3
    $region8: #{tpu_custom_call.1} parent=1 // loop_exit
      _
    %455 = vsyncpa [#allocation3], 1
    %s456 = scalar_lea.sflag [#allocation3], 1
    %457 = vsyncpa %s456, 1
    %458 = vsyncpa [#allocation6], 1
    %s459 = scalar_lea.sflag [#allocation6], 1
    %460 = vsyncpa %s459, 1
    %461 = vsyncpa [#allocation4], 1
    %s462 = scalar_lea.sflag [#allocation4], 1
    %463 = vsyncpa %s462, 1
    %464 = vsyncpa [#allocation9], 1
    %s465 = scalar_lea.sflag [#allocation9], 1
    %466 = vsyncpa %s465, 1

</llo_original>
